<compile_context>
chip_gen: v7x
topology: tpu7x:2x2x1
jax: 0.10.0
libtpu: 0.0.40
codegen_flags: <defaults>
</compile_context>

<pallas_src>
import jax
import jax.numpy as jnp
from jax.experimental import pallas as pl
from jax.experimental.pallas import tpu as pltpu


_LANE = 128
_VMEM_LIMIT_BYTES = 48 * 1024 * 1024    # scoped limit: fits v5e/v6e (128 MiB) and v7x (64 MiB/TC)
_VMEM_SIZING_BUDGET = 40 * 1024 * 1024  # what we size tiles against (headroom below the limit)


def _round_up(n, m):
    return ((n + m - 1) // m) * m


def _mlp_kernel(x_ref, *refs):
    """Fused MLP forward on one batch tile resident in VMEM.

    refs = (w1, b1, ..., w_{L-1}, b_{L-1}, w_head (1, width_p), b_head (1, 1), out_ref)
    Hidden layers: h = relu(h @ W + b) on the MXU with f32 accumulation.
    Head (width -> 1): VPU multiply + lane reduction, stored lane-dense as a
    (1, batch_tile) row (batch_tile is a multiple of 128 -> unmasked stores).
    """
    out_ref = refs[-1]
    param_refs = refs[:-1]
    n_layers = len(param_refs) // 2

    h = x_ref[...]
    for i in range(n_layers - 1):
        w = param_refs[2 * i][...]
        b = param_refs[2 * i + 1][...]              # (1, width_p) f32, broadcasts over rows
        h = jnp.dot(h.astype(w.dtype), w, preferred_element_type=jnp.float32)
        h = jnp.maximum(h + b, 0.0)                 # bias + ReLU on the f32 accumulator

    w_head = param_refs[-2][...]                    # (1, width_p) f32
    b_head = param_refs[-1][...]                    # (1, 1) f32
    y = jnp.sum(h * w_head, axis=-1)                # (batch_tile,)  XLU lane reduce
    out_ref[...] = (y[None, :] + b_head).astype(out_ref.dtype)


def regression_nn_forward(x, params, *, batch_tile=None, use_bf16=None):
    """Forward pass of RegressionNN (inference path) as one fused Pallas kernel.

    x:      (batch, d) float32
    params: list of (W, b) with W of shape (in, out) and b of shape (1, out);
            the final layer has out_features == 1.
    use_bf16: None -> auto (bf16 MXU operands when width >= 256), else bool.
    """
    batch, d = x.shape
    depth = len(params) - 1
    width = params[0][0].shape[1]
    width_p = _round_up(width, _LANE)

    if use_bf16 is None:
        use_bf16 = width >= 256
    compute_dtype = jnp.bfloat16 if use_bf16 else x.dtype
    cd_bytes = jnp.dtype(compute_dtype).itemsize

    # ---- pad hidden widths to the 128-lane grid (zero pad is exact) -------------
    padded_params = []
    for li, (w, b) in enumerate(params[:-1]):
        fan_in, fan_out = w.shape
        in_pad = 0 if li == 0 else width_p - fan_in   # keep d unpadded (saves HBM on x)
        out_pad = width_p - fan_out
        w_p = jnp.pad(w, ((0, in_pad), (0, out_pad))).astype(compute_dtype)
        b_p = jnp.pad(b, ((0, 0), (0, out_pad))).astype(jnp.float32)
        padded_params.append((w_p, b_p))

    w_head, b_head = params[-1]
    w_head_t = jnp.pad(jnp.transpose(w_head),                     # (1, width) -> (1, width_p)
                       ((0, 0), (0, width_p - w_head.shape[0]))).astype(jnp.float32)
    b_head2 = jnp.reshape(b_head, (1, 1)).astype(jnp.float32)

    # ---- derive batch_tile from an explicit VMEM budget --------------------------
    param_bytes = sum(w.size * w.dtype.itemsize + b.size * 4 for w, b in padded_params)
    param_bytes += w_head_t.size * 4 + 4
    # Conservatively assume the pipeline keeps two copies of the (constant-index) weights.
    # TODO(synk): single-buffer the weight specs / stream the hidden dim on an extra grid
    # axis for nets whose weights alone exceed the budget (e.g. width>=2048 f32 on v7x).
    resident_bytes = 2 * param_bytes
    per_row_bytes = 2 * d * cd_bytes + 2 * width_p * 4 + 2 * 4   # x (2 bufs) + f32 acts + out
    avail = max(_VMEM_SIZING_BUDGET - resident_bytes, per_row_bytes * _LANE)
    bt_vmem_max = max(_LANE, (avail // per_row_bytes) // _LANE * _LANE)

    if batch_tile is None:
        padded_min = _round_up(batch, _LANE)
        batch_tile = min(padded_min, 1024)
        if padded_min >= 2 * _LANE:   # >= 2 grid tiles -> both v7x TensorCores get work
            batch_tile = min(batch_tile, _round_up(padded_min // 2, _LANE))
        batch_tile = min(batch_tile, bt_vmem_max)
    batch_tile = max(_LANE, _round_up(batch_tile, _LANE))

    padded_batch = _round_up(batch, batch_tile)
    n_tiles = padded_batch // batch_tile

    x_p = x if padded_batch == batch else jnp.pad(x, ((0, padded_batch - batch), (0, 0)))
    x_p = x_p.astype(compute_dtype)

    # ---- specs -------------------------------------------------------------------
    in_specs = [pl.BlockSpec((batch_tile, d), lambda i: (i, 0))]
    flat_params = []
    # Weights/biases: full blocks with constant index maps -> resident across grid steps.
    for (w, b) in padded_params:
        in_specs.append(pl.BlockSpec(w.shape, lambda i: (0, 0)))
        in_specs.append(pl.BlockSpec(b.shape, lambda i: (0, 0)))
        flat_params.extend([w, b])
    in_specs.append(pl.BlockSpec(w_head_t.shape, lambda i: (0, 0)))
    in_specs.append(pl.BlockSpec(b_head2.shape, lambda i: (0, 0)))
    flat_params.extend([w_head_t, b_head2])

    # Lane-dense output: one (1, batch_tile) row per grid step, batch_tile % 128 == 0.
    out_spec = pl.BlockSpec((1, batch_tile), lambda i: (i, 0))

    flops = 2 * padded_batch * (d * width_p + (depth - 1) * width_p * width_p + width_p)
    bytes_accessed = (x_p.size * x_p.dtype.itemsize
                      + param_bytes
                      + n_tiles * batch_tile * 4)

    fn = pl.pallas_call(
        _mlp_kernel,
        out_shape=jax.ShapeDtypeStruct((n_tiles, batch_tile), jnp.float32),
        grid_spec=pltpu.PrefetchScalarGridSpec(
            num_scalar_prefetch=0,
            grid=(n_tiles,),
            in_specs=in_specs,
            out_specs=out_spec,
        ),
        compiler_params=pltpu.CompilerParams(
            dimension_semantics=("parallel",),
            vmem_limit_bytes=_VMEM_LIMIT_BYTES,
        ),
        cost_estimate=pl.CostEstimate(
            flops=flops, transcendentals=0, bytes_accessed=bytes_accessed),
    )
    out = fn(x_p, *flat_params)
    return out.reshape(-1)[:batch].reshape(batch, 1)


def init_regression_nn_params(key, d, depth, width):
    """Deterministic init mirroring nn.Linear default (uniform +-1/sqrt(fan_in)).

    Returns list of (W, b) with W: (in, out), b: (1, out).
    Layer sizes: d->width, (depth-1) x (width->width), width->1.
    """
    sizes = [(d, width)] + [(width, width)] * (depth - 1) + [(width, 1)]
    params = []
    for (fan_in, fan_out) in sizes:
        key, kw, kb = jax.random.split(key, 3)
        bound = 1.0 / jnp.sqrt(jnp.float32(fan_in))
        w = jax.random.uniform(kw, (fan_in, fan_out), jnp.float32, -bound, bound)
        b = jax.random.uniform(kb, (1, fan_out), jnp.float32, -bound, bound)
        params.append((w, b))
    return params


def reference_forward(x, params):
    """Plain-JAX reference for correctness checking."""
    h = x
    for i, (w, b) in enumerate(params):
        h = h @ w + b
        if i < len(params) - 1:
            h = jnp.maximum(h, 0.0)
    return h


if __name__ == "__main__":
    # Small shapes consistent with the module: batch=16, d=16, depth=3, width=32.
    # forward(x, is_training=False) -> input dropout is skipped (inference path).
    # TODO(synk): input_dropout (training-only stochastic op) not implemented in-kernel.
    batch, d, depth, width = 16, 16, 3, 32

    key = jax.random.PRNGKey(0)
    key_x, key_p = jax.random.split(key)
    x = jax.random.normal(key_x, (batch, d), jnp.float32)
    params = init_regression_nn_params(key_p, d, depth, width)

    out = regression_nn_forward(x, params)   # single 128-row grid step at this batch size
    out = jax.block_until_ready(out)

    ref = reference_forward(x, params)
    assert out.shape == (batch, 1)
    assert jnp.allclose(out, ref, atol=1e-5, rtol=1e-5), "mismatch vs reference"

    print("KERNEL_OK")
</pallas_src>

<mosaic_0001>
module attributes {stable_mosaic.version = 11 : i64} {
  func.func @_mlp_kernel(%arg0: i32, %arg1: memref<128x16xf32, #tpu.memory_space<vmem>>, %arg2: memref<16x128xf32, #tpu.memory_space<vmem>>, %arg3: memref<1x128xf32, #tpu.memory_space<vmem>>, %arg4: memref<128x128xf32, #tpu.memory_space<vmem>>, %arg5: memref<1x128xf32, #tpu.memory_space<vmem>>, %arg6: memref<128x128xf32, #tpu.memory_space<vmem>>, %arg7: memref<1x128xf32, #tpu.memory_space<vmem>>, %arg8: memref<1x128xf32, #tpu.memory_space<vmem>>, %arg9: memref<1x1xf32, #tpu.memory_space<vmem>>, %arg10: memref<1x128xf32, #tpu.memory_space<vmem>>) attributes {dimension_semantics = [#tpu.dimension_semantics<parallel>], iteration_bounds = array<i64: 1>, scalar_prefetch = 0 : i64, scratch_operands = 0 : i64, tpu.core_type = #tpu.core_type<tc>, window_params = [{transform_indices = @transform_0, window_bounds = array<i64: 128, 16>}, {pipeline_mode = #tpu.pipeline_mode<synchronous>, transform_indices = @transform_1, window_bounds = array<i64: 16, 128>}, {pipeline_mode = #tpu.pipeline_mode<synchronous>, transform_indices = @transform_2, window_bounds = array<i64: 1, 128>}, {pipeline_mode = #tpu.pipeline_mode<synchronous>, transform_indices = @transform_3, window_bounds = array<i64: 128, 128>}, {pipeline_mode = #tpu.pipeline_mode<synchronous>, transform_indices = @transform_4, window_bounds = array<i64: 1, 128>}, {pipeline_mode = #tpu.pipeline_mode<synchronous>, transform_indices = @transform_5, window_bounds = array<i64: 128, 128>}, {pipeline_mode = #tpu.pipeline_mode<synchronous>, transform_indices = @transform_6, window_bounds = array<i64: 1, 128>}, {pipeline_mode = #tpu.pipeline_mode<synchronous>, transform_indices = @transform_7, window_bounds = array<i64: 1, 128>}, {pipeline_mode = #tpu.pipeline_mode<synchronous>, transform_indices = @transform_8, window_bounds = array<i64: 1, 1>}, {transform_indices = @transform_9, window_bounds = array<i64: 1, 128>}]} {
    %c0 = arith.constant 0 : index
    %c0_0 = arith.constant 0 : index
    %0 = vector.load %arg1[%c0, %c0_0] : memref<128x16xf32, #tpu.memory_space<vmem>>, vector<128x16xf32>
    %c0_1 = arith.constant 0 : index
    %c0_2 = arith.constant 0 : index
    %1 = vector.load %arg2[%c0_1, %c0_2] : memref<16x128xf32, #tpu.memory_space<vmem>>, vector<16x128xf32>
    %c0_3 = arith.constant 0 : index
    %c0_4 = arith.constant 0 : index
    %2 = vector.load %arg3[%c0_3, %c0_4] : memref<1x128xf32, #tpu.memory_space<vmem>>, vector<1x128xf32>
    %cst = arith.constant dense<0.000000e+00> : vector<128x128xf32>
    %3 = tpu.matmul %0, %1, %cst {dimension_numbers = #tpu.dot_dimension_numbers<[1], [0], [0], [1], [0, 0, 1, 1], [], []>} : vector<128x16xf32>, vector<16x128xf32>, vector<128x128xf32> -> vector<128x128xf32>
    %4 = vector.broadcast %2 : vector<1x128xf32> to vector<128x128xf32>
    %5 = arith.addf %3, %4 : vector<128x128xf32>
    %cst_5 = arith.constant 0.000000e+00 : f32
    %6 = vector.broadcast %cst_5 : f32 to vector<128x128xf32>
    %7 = arith.maximumf %5, %6 : vector<128x128xf32>
    %c0_6 = arith.constant 0 : index
    %c0_7 = arith.constant 0 : index
    %8 = vector.load %arg4[%c0_6, %c0_7] : memref<128x128xf32, #tpu.memory_space<vmem>>, vector<128x128xf32>
    %c0_8 = arith.constant 0 : index
    %c0_9 = arith.constant 0 : index
    %9 = vector.load %arg5[%c0_8, %c0_9] : memref<1x128xf32, #tpu.memory_space<vmem>>, vector<1x128xf32>
    %cst_10 = arith.constant dense<0.000000e+00> : vector<128x128xf32>
    %10 = tpu.matmul %7, %8, %cst_10 {dimension_numbers = #tpu.dot_dimension_numbers<[1], [0], [0], [1], [0, 0, 1, 1], [], []>} : vector<128x128xf32>, vector<128x128xf32>, vector<128x128xf32> -> vector<128x128xf32>
    %11 = vector.broadcast %9 : vector<1x128xf32> to vector<128x128xf32>
    %12 = arith.addf %10, %11 : vector<128x128xf32>
    %cst_11 = arith.constant 0.000000e+00 : f32
    %13 = vector.broadcast %cst_11 : f32 to vector<128x128xf32>
    %14 = arith.maximumf %12, %13 : vector<128x128xf32>
    %c0_12 = arith.constant 0 : index
    %c0_13 = arith.constant 0 : index
    %15 = vector.load %arg6[%c0_12, %c0_13] : memref<128x128xf32, #tpu.memory_space<vmem>>, vector<128x128xf32>
    %c0_14 = arith.constant 0 : index
    %c0_15 = arith.constant 0 : index
    %16 = vector.load %arg7[%c0_14, %c0_15] : memref<1x128xf32, #tpu.memory_space<vmem>>, vector<1x128xf32>
    %cst_16 = arith.constant dense<0.000000e+00> : vector<128x128xf32>
    %17 = tpu.matmul %14, %15, %cst_16 {dimension_numbers = #tpu.dot_dimension_numbers<[1], [0], [0], [1], [0, 0, 1, 1], [], []>} : vector<128x128xf32>, vector<128x128xf32>, vector<128x128xf32> -> vector<128x128xf32>
    %18 = vector.broadcast %16 : vector<1x128xf32> to vector<128x128xf32>
    %19 = arith.addf %17, %18 : vector<128x128xf32>
    %cst_17 = arith.constant 0.000000e+00 : f32
    %20 = vector.broadcast %cst_17 : f32 to vector<128x128xf32>
    %21 = arith.maximumf %19, %20 : vector<128x128xf32>
    %c0_18 = arith.constant 0 : index
    %c0_19 = arith.constant 0 : index
    %22 = vector.load %arg8[%c0_18, %c0_19] : memref<1x128xf32, #tpu.memory_space<vmem>>, vector<1x128xf32>
    %c0_20 = arith.constant 0 : index
    %c0_21 = arith.constant 0 : index
    %23 = vector.load %arg9[%c0_20, %c0_21] : memref<1x1xf32, #tpu.memory_space<vmem>>, vector<1x1xf32>
    %24 = vector.broadcast %22 : vector<1x128xf32> to vector<128x128xf32>
    %25 = arith.mulf %21, %24 : vector<128x128xf32>
    %cst_22 = arith.constant dense<0.000000e+00> : vector<128xf32>
    %26 = vector.multi_reduction <add>, %25, %cst_22 [1] : vector<128x128xf32> to vector<128xf32>
    %27 = vector.shape_cast %26 : vector<128xf32> to vector<1x128xf32>
    %28 = vector.broadcast %23 : vector<1x1xf32> to vector<1x128xf32>
    %29 = arith.addf %27, %28 : vector<1x128xf32>
    %c0_23 = arith.constant 0 : index
    %c0_24 = arith.constant 0 : index
    %30 = vector.load %arg10[%c0_23, %c0_24] : memref<1x128xf32, #tpu.memory_space<vmem>>, vector<1x128xf32>
    tpu.vector_store %arg10[%c0_23, %c0_24], %29 {strides = array<i32>} : memref<1x128xf32, #tpu.memory_space<vmem>>, vector<1x128xf32>,
    return
  }
  func.func @transform_0(%arg0: i32) -> (i32, i32) {
    %c0_i32 = arith.constant 0 : i32
    %c0_i32_0 = arith.constant 0 : i32
    return %arg0, %c0_i32 : i32, i32
  }
  func.func @transform_1(%arg0: i32) -> (i32, i32) {
    %c0_i32 = arith.constant 0 : i32
    %c0_i32_0 = arith.constant 0 : i32
    %c0_i32_1 = arith.constant 0 : i32
    return %c0_i32, %c0_i32_0 : i32, i32
  }
  func.func @transform_2(%arg0: i32) -> (i32, i32) {
    %c0_i32 = arith.constant 0 : i32
    %c0_i32_0 = arith.constant 0 : i32
    %c0_i32_1 = arith.constant 0 : i32
    return %c0_i32, %c0_i32_0 : i32, i32
  }
  func.func @transform_3(%arg0: i32) -> (i32, i32) {
    %c0_i32 = arith.constant 0 : i32
    %c0_i32_0 = arith.constant 0 : i32
    %c0_i32_1 = arith.constant 0 : i32
    return %c0_i32, %c0_i32_0 : i32, i32
  }
  func.func @transform_4(%arg0: i32) -> (i32, i32) {
    %c0_i32 = arith.constant 0 : i32
    %c0_i32_0 = arith.constant 0 : i32
    %c0_i32_1 = arith.constant 0 : i32
    return %c0_i32, %c0_i32_0 : i32, i32
  }
  func.func @transform_5(%arg0: i32) -> (i32, i32) {
    %c0_i32 = arith.constant 0 : i32
    %c0_i32_0 = arith.constant 0 : i32
    %c0_i32_1 = arith.constant 0 : i32
    return %c0_i32, %c0_i32_0 : i32, i32
  }
  func.func @transform_6(%arg0: i32) -> (i32, i32) {
    %c0_i32 = arith.constant 0 : i32
    %c0_i32_0 = arith.constant 0 : i32
    %c0_i32_1 = arith.constant 0 : i32
    return %c0_i32, %c0_i32_0 : i32, i32
  }
  func.func @transform_7(%arg0: i32) -> (i32, i32) {
    %c0_i32 = arith.constant 0 : i32
    %c0_i32_0 = arith.constant 0 : i32
    %c0_i32_1 = arith.constant 0 : i32
    return %c0_i32, %c0_i32_0 : i32, i32
  }
  func.func @transform_8(%arg0: i32) -> (i32, i32) {
    %c0_i32 = arith.constant 0 : i32
    %c0_i32_0 = arith.constant 0 : i32
    %c0_i32_1 = arith.constant 0 : i32
    return %c0_i32, %c0_i32_0 : i32, i32
  }
  func.func @transform_9(%arg0: i32) -> (i32, i32) {
    %c0_i32 = arith.constant 0 : i32
    %c0_i32_0 = arith.constant 0 : i32
    return %arg0, %c0_i32 : i32, i32
  }
}

</mosaic_0001>

<llo_original>
// kernel: tpu_custom_call.1
$region0: #{tpu_custom_call.1}
  #allocation0 [shape = 'u32[]', space=smem, size = 0x4, offset = 0x4, fixed_abs, tag = 'smem constant byte address 0x4 - core index']
  #allocation1 [shape = 'u32[144,128]{1,0:T(1,128)}', space=vmem, size = 0x12000, scoped, tag = 'internal scratch']
  #allocation2 [shape = 'f32[1,1]{1,0:T(1,128)S(1)}', space=vmem, size = 0x200, scoped, tag = 'scoped memory for tpu_custom_call.1']
  %s0 = inlined_call_operand.vmem [shape: f32[128,16], index: 0, kind: input, shape index: {}]
  %s1 = inlined_call_operand.vmem [shape: f32[16,128], index: 1, kind: input, shape index: {}]
  %s2 = inlined_call_operand.vmem [shape: f32[1,128], index: 2, kind: input, shape index: {}]
  %s3 = inlined_call_operand.vmem [shape: f32[128,128], index: 3, kind: input, shape index: {}]
  %s4 = inlined_call_operand.vmem [shape: f32[1,128], index: 4, kind: input, shape index: {}]
  %s5 = inlined_call_operand.hbm [shape: f32[128,128], index: 5, kind: input, shape index: {}]
  %s6 = inlined_call_operand.vmem [shape: f32[1,128], index: 6, kind: input, shape index: {}]
  %s7 = inlined_call_operand.vmem [shape: f32[1,128], index: 7, kind: input, shape index: {}]
  %s8 = inlined_call_operand.<no memory space> [shape: f32[1,1], index: 8, kind: input, shape index: {}]
  %s9 = inlined_call_operand.hbm [shape: f32[1,128], index: 9, kind: output, shape index: {}]
  %s10 = sld [smem:[#allocation0]]
  $region50: #{tpu_custom_call.1} parent=0
    _
  %s12 = ssub.s32 1, %s10
  %s13 = scalar_select 0, %s12, %s10
  %v14 = vstv %s8
  %15 = vst [vmem:[#allocation2] sm:$0x1] %v14
  $region1: #{tpu_custom_call.1} parent=0
    #allocation3 [shape = 'u8[65536]{0}', space=vmem, size = 0x10000, scoped, tag = 'input window, operand 5, single buffered']
    #allocation4 [shape = 's32[1]{0}', space=sflag, size = 0x4, scoped, tag = 'scoped memory for tpu_custom_call.1']
    #allocation5 [shape = 's32[1]{0}', space=sflag, size = 0x4, scoped, tag = 'scoped memory for tpu_custom_call.1']
    #allocation6 [shape = 'u8[512]{0}', space=vmem, size = 0x400, scoped, tag = 'output window, operand 0, single buffered']
    %16 = vsyncpa [#allocation4], 0
    %17 = vsyncpa [#allocation5], 0
    // Predicated region
    $region2: #{tpu_custom_call.1} parent=1 // pred_check
      _
    $region3: #{tpu_custom_call.1} parent=1 // pred_check_branch
      %19 = sbr.rel (0) target = $region5
    $region4: #{tpu_custom_call.1} parent=1 // pred_region
      _
    $region5: #{tpu_custom_call.1} parent=1 // pred_fallthru
      _
    // Predicated region
    $region6: #{tpu_custom_call.1} parent=1 // pred_check
      _
    $region7: #{tpu_custom_call.1} parent=1 // pred_check_branch
      %21 = sbr.rel (0) target = $region9
    $region8: #{tpu_custom_call.1} parent=1 // pred_region
      _
    $region9: #{tpu_custom_call.1} parent=1 // pred_fallthru
      _
    // Predicated region
    $region10: #{tpu_custom_call.1} parent=1 // pred_check
      _
    $region11: #{tpu_custom_call.1} parent=1 // pred_check_branch
      %23 = sbr.rel (0) target = $region13
    $region12: #{tpu_custom_call.1} parent=1 // pred_region
      _
    $region13: #{tpu_custom_call.1} parent=1 // pred_fallthru
      _
    // Predicated region
    $region14: #{tpu_custom_call.1} parent=1 // pred_check
      _
    $region15: #{tpu_custom_call.1} parent=1 // pred_check_branch
      %25 = sbr.rel (0) target = $region17
    $region16: #{tpu_custom_call.1} parent=1 // pred_region
      _
    $region17: #{tpu_custom_call.1} parent=1 // pred_fallthru
      _
    // Predicated region
    $region18: #{tpu_custom_call.1} parent=1 // pred_check
      _
    $region19: #{tpu_custom_call.1} parent=1 // pred_check_branch
      %27 = sbr.rel (0) target = $region21
    $region20: #{tpu_custom_call.1} parent=1 // pred_region
      _
    $region21: #{tpu_custom_call.1} parent=1 // pred_fallthru
      _
    // Predicated region
    $region22: #{tpu_custom_call.1} parent=1 // pred_check
      _
    $region23: #{tpu_custom_call.1} parent=1 // pred_check_branch
      %29 = sbr.rel (0) target = $region25
    $region24: #{tpu_custom_call.1} parent=1 // pred_region
      %s31 = ssub.s32 2048, 2048
      %32 = vsyncadd [#allocation4], %s31
      %s33 = sshll.u32 [#allocation3], 4
      %s34 = int_to_ptr.vmem [resolvable:$true] %s33
      %39 = dma.hbm_to_vmem [thread:$0]  %s5, 2048, %s34, [#allocation4], 128, 128, 8
    $region25: #{tpu_custom_call.1} parent=1 // pred_fallthru
      _
    // Predicated region
    $region26: #{tpu_custom_call.1} parent=1 // pred_check
      _
    $region27: #{tpu_custom_call.1} parent=1 // pred_check_branch
      %41 = sbr.rel (0) target = $region29
    $region28: #{tpu_custom_call.1} parent=1 // pred_region
      _
    $region29: #{tpu_custom_call.1} parent=1 // pred_fallthru
      _
    // Predicated region
    $region30: #{tpu_custom_call.1} parent=1 // pred_check
      _
    $region31: #{tpu_custom_call.1} parent=1 // pred_check_branch
      %43 = sbr.rel (0) target = $region33
    $region32: #{tpu_custom_call.1} parent=1 // pred_region
      _
    $region33: #{tpu_custom_call.1} parent=1 // pred_fallthru
      _
    // Predicated region
    $region34: #{tpu_custom_call.1} parent=1 // pred_check
      _
    $region35: #{tpu_custom_call.1} parent=1 // pred_check_branch
      %45 = sbr.rel (0) target = $region37
    $region36: #{tpu_custom_call.1} parent=1 // pred_region
      _
    $region37: #{tpu_custom_call.1} parent=1 // pred_fallthru
      _
    // Predicated region
    $region38: #{tpu_custom_call.1} parent=1 // pred_check
      _
    $region39: #{tpu_custom_call.1} parent=1 // pred_check_branch
      %47 = sbr.rel (0) target = $region41
    $region40: #{tpu_custom_call.1} parent=1 // pred_region
      %48 = dma.done [#allocation4], 2048
    $region41: #{tpu_custom_call.1} parent=1 // pred_fallthru
      _
    %v49 = vld [vmem:[%s0] sm:$0xff]
    %v50 = vld [vmem:[%s0 + $0x8] sm:$0xff]
    %v51 = vld [vmem:[%s0 + $0x10] sm:$0xff]
    %v52 = vld [vmem:[%s0 + $0x18] sm:$0xff]
    %v53 = vld [vmem:[%s0 + $0x20] sm:$0xff]
    %v54 = vld [vmem:[%s0 + $0x28] sm:$0xff]
    %v55 = vld [vmem:[%s0 + $0x30] sm:$0xff]
    %v56 = vld [vmem:[%s0 + $0x38] sm:$0xff]
    %v57 = vld [vmem:[%s0 + $0x40] sm:$0xff]
    %v58 = vld [vmem:[%s0 + $0x48] sm:$0xff]
    %v59 = vld [vmem:[%s0 + $0x50] sm:$0xff]
    %v60 = vld [vmem:[%s0 + $0x58] sm:$0xff]
    %v61 = vld [vmem:[%s0 + $0x60] sm:$0xff]
    %v62 = vld [vmem:[%s0 + $0x68] sm:$0xff]
    %v63 = vld [vmem:[%s0 + $0x70] sm:$0xff]
    %v64 = vld [vmem:[%s0 + $0x78] sm:$0xff]
    %v65 = vld [vmem:[%s1] sm:$0xff]
    %v66 = vld [vmem:[%s1 + $0x8] sm:$0xff]
    %v67 = vld [vmem:[%s2] sm:$0x1]
    %v69 = vlaneseq
    %v70 = vshrl.u32 %v69, 7
    %v71 = vsub.s32 0, %v70
    %v72 = vrot.slane %v67, %v71
    %vm74 = vcmask 130048
    %v76 = vsel %vm74, %v49, 0
    %v79 = vsel %vm74, %v50, 0
    %v82 = vsel %vm74, %v51, 0
    %v85 = vsel %vm74, %v52, 0
    %v88 = vsel %vm74, %v53, 0
    %v91 = vsel %vm74, %v54, 0
    %v94 = vsel %vm74, %v55, 0
    %v97 = vsel %vm74, %v56, 0
    %v100 = vsel %vm74, %v57, 0
    %v103 = vsel %vm74, %v58, 0
    %v106 = vsel %vm74, %v59, 0
    %v109 = vsel %vm74, %v60, 0
    %v112 = vsel %vm74, %v61, 0
    %v115 = vsel %vm74, %v62, 0
    %v118 = vsel %vm74, %v63, 0
    %v121 = vsel %vm74, %v64, 0
    %123 = vmatprep.subr.mxu0 0.0
    %124 = vmatpush1.msra.mxu0 %v65
    %125 = vmatprep.subr.mxu0 0.0
    %126 = vmatpush1.msra.mxu0 %v66
    %127 = vmatprep.subr.mxu0 0.0
    %128 = vmatpush1.msra.mxu0 0.0
    %129 = vmatprep.subr.mxu0 0.0
    %130 = vmatpush1.msra.mxu0 0.0
    %131 = vmatprep.subr.mxu0 0.0
    %132 = vmatpush1.msra.mxu0 0.0
    %133 = vmatprep.subr.mxu0 0.0
    %134 = vmatpush1.msra.mxu0 0.0
    %135 = vmatprep.subr.mxu0 0.0
    %136 = vmatpush1.msra.mxu0 0.0
    %137 = vmatprep.subr.mxu0 0.0
    %138 = vmatpush1.msra.mxu0 0.0
    %139 = vmatprep.subr.mxu0 0.0
    %140 = vmatpush1.msra.mxu0 0.0
    %141 = vmatprep.subr.mxu0 0.0
    %142 = vmatpush1.msra.mxu0 0.0
    %143 = vmatprep.subr.mxu0 0.0
    %144 = vmatpush1.msra.mxu0 0.0
    %145 = vmatprep.subr.mxu0 0.0
    %146 = vmatpush1.msra.mxu0 0.0
    %147 = vmatprep.subr.mxu0 0.0
    %148 = vmatpush1.msra.mxu0 0.0
    %149 = vmatprep.subr.mxu0 0.0
    %150 = vmatpush1.msra.mxu0 0.0
    %151 = vmatprep.subr.mxu0 0.0
    %152 = vmatpush1.msra.mxu0 0.0
    %153 = vmatprep.subr.mxu0 0.0
    %154 = vmatpush1.msra.mxu0 0.0
    %155 = vmatprep.subr.mxu0 0.0
    %156 = vmatpush1.msra.mxu0 0.0
    %157 = vmatprep.subr.mxu0 0.0
    %158 = vmatpush1.msra.mxu0 0.0
    %159 = vmatprep.subr.mxu0 0.0
    %160 = vmatpush1.msra.mxu0 0.0
    %161 = vmatprep.subr.mxu0 0.0
    %162 = vmatpush1.msra.mxu0 0.0
    %163 = vmatprep.subr.mxu0 0.0
    %164 = vmatpush1.msra.mxu0 0.0
    %165 = vmatprep.subr.mxu0 0.0
    %166 = vmatpush1.msra.mxu0 0.0
    %167 = vmatprep.subr.mxu0 0.0
    %168 = vmatpush1.msra.mxu0 0.0
    %169 = vmatprep.subr.mxu0 0.0
    %170 = vmatpush1.msra.mxu0 0.0
    %171 = vmatprep.subr.mxu0 0.0
    %172 = vmatpush1.msra.mxu0 0.0
    %173 = vmatprep.subr.mxu0 0.0
    %174 = vmatpush1.msra.mxu0 0.0
    %175 = vmatprep.subr.mxu0 0.0
    %176 = vmatpush1.msra.mxu0 0.0
    %177 = vmatprep.subr.mxu0 0.0
    %178 = vmatpush1.msra.mxu0 0.0
    %179 = vmatprep.subr.mxu0 0.0
    %180 = vmatpush1.msra.mxu0 0.0
    %181 = vmatprep.subr.mxu0 0.0
    %182 = vmatpush1.msra.mxu0 0.0
    %183 = vmatprep.subr.mxu0 0.0
    %184 = vmatpush1.msra.mxu0 0.0
    %185 = vmatprep.subr.mxu0 0.0
    %186 = vmatpush1.msra.mxu0 0.0
    %187 = vmatprep.mubr.f32.mxu0 0.0
    %188 = vmatmul.mubr.f32.gmra.mrb[0].mxu0 %v76
    %v189 = vpop.f32.mrb[0].mxu0
    %v190 = vadd.f32 %v72, %v189
    %v191 = vpop.f32.mrb[0].mxu0
    %192 = vmatprep.mubr.f32.mxu0 0.0
    %193 = vmatmul.mubr.f32.gmra.mrb[0].mxu0 %v79
    %v194 = vpop.f32.mrb[0].mxu0
    %v195 = vadd.f32 %v72, %v194
    %v196 = vpop.f32.mrb[0].mxu0
    %197 = vmatprep.mubr.f32.mxu0 0.0
    %198 = vmatmul.mubr.f32.gmra.mrb[0].mxu0 %v82
    %v199 = vpop.f32.mrb[0].mxu0
    %v200 = vadd.f32 %v72, %v199
    %v201 = vpop.f32.mrb[0].mxu0
    %202 = vmatprep.mubr.f32.mxu0 0.0
    %203 = vmatmul.mubr.f32.gmra.mrb[0].mxu0 %v85
    %v204 = vpop.f32.mrb[0].mxu0
    %v205 = vadd.f32 %v72, %v204
    %v206 = vpop.f32.mrb[0].mxu0
    %207 = vmatprep.mubr.f32.mxu0 0.0
    %208 = vmatmul.mubr.f32.gmra.mrb[0].mxu0 %v88
    %v209 = vpop.f32.mrb[0].mxu0
    %v210 = vadd.f32 %v72, %v209
    %v211 = vpop.f32.mrb[0].mxu0
    %212 = vmatprep.mubr.f32.mxu0 0.0
    %213 = vmatmul.mubr.f32.gmra.mrb[0].mxu0 %v91
    %v214 = vpop.f32.mrb[0].mxu0
    %v215 = vadd.f32 %v72, %v214
    %v216 = vpop.f32.mrb[0].mxu0
    %217 = vmatprep.mubr.f32.mxu0 0.0
    %218 = vmatmul.mubr.f32.gmra.mrb[0].mxu0 %v94
    %v219 = vpop.f32.mrb[0].mxu0
    %v220 = vadd.f32 %v72, %v219
    %v221 = vpop.f32.mrb[0].mxu0
    %222 = vmatprep.mubr.f32.mxu0 0.0
    %223 = vmatmul.mubr.f32.gmra.mrb[0].mxu0 %v97
    %v224 = vpop.f32.mrb[0].mxu0
    %v225 = vadd.f32 %v72, %v224
    %v226 = vpop.f32.mrb[0].mxu0
    %227 = vmatprep.mubr.f32.mxu0 0.0
    %228 = vmatmul.mubr.f32.gmra.mrb[0].mxu0 %v100
    %v229 = vpop.f32.mrb[0].mxu0
    %v230 = vadd.f32 %v72, %v229
    %v231 = vpop.f32.mrb[0].mxu0
    %232 = vmatprep.mubr.f32.mxu0 0.0
    %233 = vmatmul.mubr.f32.gmra.mrb[0].mxu0 %v103
    %v234 = vpop.f32.mrb[0].mxu0
    %v235 = vadd.f32 %v72, %v234
    %v236 = vpop.f32.mrb[0].mxu0
    %237 = vmatprep.mubr.f32.mxu0 0.0
    %238 = vmatmul.mubr.f32.gmra.mrb[0].mxu0 %v106
    %v239 = vpop.f32.mrb[0].mxu0
    %v240 = vadd.f32 %v72, %v239
    %v241 = vpop.f32.mrb[0].mxu0
    %242 = vmatprep.mubr.f32.mxu0 0.0
    %243 = vmatmul.mubr.f32.gmra.mrb[0].mxu0 %v109
    %v244 = vpop.f32.mrb[0].mxu0
    %v245 = vadd.f32 %v72, %v244
    %v246 = vpop.f32.mrb[0].mxu0
    %247 = vmatprep.mubr.f32.mxu0 0.0
    %248 = vmatmul.mubr.f32.gmra.mrb[0].mxu0 %v112
    %v249 = vpop.f32.mrb[0].mxu0
    %v250 = vadd.f32 %v72, %v249
    %v251 = vpop.f32.mrb[0].mxu0
    %252 = vmatprep.mubr.f32.mxu0 0.0
    %253 = vmatmul.mubr.f32.gmra.mrb[0].mxu0 %v115
    %v254 = vpop.f32.mrb[0].mxu0
    %v255 = vadd.f32 %v72, %v254
    %v256 = vpop.f32.mrb[0].mxu0
    %257 = vmatprep.mubr.f32.mxu0 0.0
    %258 = vmatmul.mubr.f32.gmra.mrb[0].mxu0 %v118
    %v259 = vpop.f32.mrb[0].mxu0
    %v260 = vadd.f32 %v72, %v259
    %v261 = vpop.f32.mrb[0].mxu0
    %262 = vmatprep.mubr.f32.mxu0 0.0
    %263 = vmatmul.mubr.f32.gmra.mrb[0].mxu0 %v121
    %v264 = vpop.f32.mrb[0].mxu0
    %v265 = vadd.f32 %v72, %v264
    %v266 = vpop.f32.mrb[0].mxu0
    %267 = vdwg.mxu0
    %v268 = vmax.f32 %v190, 0.0
    %v269 = vmax.f32 %v195, 0.0
    %v270 = vmax.f32 %v200, 0.0
    %v271 = vmax.f32 %v205, 0.0
    %v272 = vmax.f32 %v210, 0.0
    %v273 = vmax.f32 %v215, 0.0
    %v274 = vmax.f32 %v220, 0.0
    %v275 = vmax.f32 %v225, 0.0
    %v276 = vmax.f32 %v230, 0.0
    %v277 = vmax.f32 %v235, 0.0
    %v278 = vmax.f32 %v240, 0.0
    %v279 = vmax.f32 %v245, 0.0
    %v280 = vmax.f32 %v250, 0.0
    %v281 = vmax.f32 %v255, 0.0
    %v282 = vmax.f32 %v260, 0.0
    %v283 = vmax.f32 %v265, 0.0
    %v284 = vld [vmem:[%s3] sm:$0xff]
    %v285 = vld [vmem:[%s3 + $0x8] sm:$0xff]
    %v286 = vld [vmem:[%s3 + $0x10] sm:$0xff]
    %v287 = vld [vmem:[%s3 + $0x18] sm:$0xff]
    %v288 = vld [vmem:[%s3 + $0x20] sm:$0xff]
    %v289 = vld [vmem:[%s3 + $0x28] sm:$0xff]
    %v290 = vld [vmem:[%s3 + $0x30] sm:$0xff]
    %v291 = vld [vmem:[%s3 + $0x38] sm:$0xff]
    %v292 = vld [vmem:[%s3 + $0x40] sm:$0xff]
    %v293 = vld [vmem:[%s3 + $0x48] sm:$0xff]
    %v294 = vld [vmem:[%s3 + $0x50] sm:$0xff]
    %v295 = vld [vmem:[%s3 + $0x58] sm:$0xff]
    %v296 = vld [vmem:[%s3 + $0x60] sm:$0xff]
    %v297 = vld [vmem:[%s3 + $0x68] sm:$0xff]
    %v298 = vld [vmem:[%s3 + $0x70] sm:$0xff]
    %v299 = vld [vmem:[%s3 + $0x78] sm:$0xff]
    %v300 = vld [vmem:[%s4] sm:$0x1]
    %v302 = vlaneseq
    %v303 = vshrl.u32 %v302, 7
    %v304 = vsub.s32 0, %v303
    %v305 = vrot.slane %v300, %v304
    %307 = vmatprep.subr.mxu0 0.0
    %308 = vmatpush1.msra.mxu0 %v284
    %309 = vmatprep.subr.mxu0 0.0
    %310 = vmatpush1.msra.mxu0 %v285
    %311 = vmatprep.subr.mxu0 0.0
    %312 = vmatpush1.msra.mxu0 %v286
    %313 = vmatprep.subr.mxu0 0.0
    %314 = vmatpush1.msra.mxu0 %v287
    %315 = vmatprep.subr.mxu0 0.0
    %316 = vmatpush1.msra.mxu0 %v288
    %317 = vmatprep.subr.mxu0 0.0
    %318 = vmatpush1.msra.mxu0 %v289
    %319 = vmatprep.subr.mxu0 0.0
    %320 = vmatpush1.msra.mxu0 %v290
    %321 = vmatprep.subr.mxu0 0.0
    %322 = vmatpush1.msra.mxu0 %v291
    %323 = vmatprep.subr.mxu0 0.0
    %324 = vmatpush1.msra.mxu0 %v292
    %325 = vmatprep.subr.mxu0 0.0
    %326 = vmatpush1.msra.mxu0 %v293
    %327 = vmatprep.subr.mxu0 0.0
    %328 = vmatpush1.msra.mxu0 %v294
    %329 = vmatprep.subr.mxu0 0.0
    %330 = vmatpush1.msra.mxu0 %v295
    %331 = vmatprep.subr.mxu0 0.0
    %332 = vmatpush1.msra.mxu0 %v296
    %333 = vmatprep.subr.mxu0 0.0
    %334 = vmatpush1.msra.mxu0 %v297
    %335 = vmatprep.subr.mxu0 0.0
    %336 = vmatpush1.msra.mxu0 %v298
    %337 = vmatprep.subr.mxu0 0.0
    %338 = vmatpush1.msra.mxu0 %v299
    %339 = vmatprep.subr.mxu0 0.0
    %340 = vmatpush1.msra.mxu0 0.0
    %341 = vmatprep.subr.mxu0 0.0
    %342 = vmatpush1.msra.mxu0 0.0
    %343 = vmatprep.subr.mxu0 0.0
    %344 = vmatpush1.msra.mxu0 0.0
    %345 = vmatprep.subr.mxu0 0.0
    %346 = vmatpush1.msra.mxu0 0.0
    %347 = vmatprep.subr.mxu0 0.0
    %348 = vmatpush1.msra.mxu0 0.0
    %349 = vmatprep.subr.mxu0 0.0
    %350 = vmatpush1.msra.mxu0 0.0
    %351 = vmatprep.subr.mxu0 0.0
    %352 = vmatpush1.msra.mxu0 0.0
    %353 = vmatprep.subr.mxu0 0.0
    %354 = vmatpush1.msra.mxu0 0.0
    %355 = vmatprep.subr.mxu0 0.0
    %356 = vmatpush1.msra.mxu0 0.0
    %357 = vmatprep.subr.mxu0 0.0
    %358 = vmatpush1.msra.mxu0 0.0
    %359 = vmatprep.subr.mxu0 0.0
    %360 = vmatpush1.msra.mxu0 0.0
    %361 = vmatprep.subr.mxu0 0.0
    %362 = vmatpush1.msra.mxu0 0.0
    %363 = vmatprep.subr.mxu0 0.0
    %364 = vmatpush1.msra.mxu0 0.0
    %365 = vmatprep.subr.mxu0 0.0
    %366 = vmatpush1.msra.mxu0 0.0
    %367 = vmatprep.subr.mxu0 0.0
    %368 = vmatpush1.msra.mxu0 0.0
    %369 = vmatprep.subr.mxu0 0.0
    %370 = vmatpush1.msra.mxu0 0.0
    %371 = vmatprep.mubr.f32.mxu0 0.0
    %372 = vmatmul.mubr.f32.gmra.mrb[0].mxu0 %v268
    %v373 = vpop.f32.mrb[0].mxu0
    %v374 = vadd.f32 %v305, %v373
    %v375 = vpop.f32.mrb[0].mxu0
    %376 = vmatprep.mubr.f32.mxu0 0.0
    %377 = vmatmul.mubr.f32.gmra.mrb[0].mxu0 %v269
    %v378 = vpop.f32.mrb[0].mxu0
    %v379 = vadd.f32 %v305, %v378
    %v380 = vpop.f32.mrb[0].mxu0
    %381 = vmatprep.mubr.f32.mxu0 0.0
    %382 = vmatmul.mubr.f32.gmra.mrb[0].mxu0 %v270
    %v383 = vpop.f32.mrb[0].mxu0
    %v384 = vadd.f32 %v305, %v383
    %v385 = vpop.f32.mrb[0].mxu0
    %386 = vmatprep.mubr.f32.mxu0 0.0
    %387 = vmatmul.mubr.f32.gmra.mrb[0].mxu0 %v271
    %v388 = vpop.f32.mrb[0].mxu0
    %v389 = vadd.f32 %v305, %v388
    %v390 = vpop.f32.mrb[0].mxu0
    %391 = vmatprep.mubr.f32.mxu0 0.0
    %392 = vmatmul.mubr.f32.gmra.mrb[0].mxu0 %v272
    %v393 = vpop.f32.mrb[0].mxu0
    %v394 = vadd.f32 %v305, %v393
    %v395 = vpop.f32.mrb[0].mxu0
    %396 = vmatprep.mubr.f32.mxu0 0.0
    %397 = vmatmul.mubr.f32.gmra.mrb[0].mxu0 %v273
    %v398 = vpop.f32.mrb[0].mxu0
    %v399 = vadd.f32 %v305, %v398
    %v400 = vpop.f32.mrb[0].mxu0
    %401 = vmatprep.mubr.f32.mxu0 0.0
    %402 = vmatmul.mubr.f32.gmra.mrb[0].mxu0 %v274
    %v403 = vpop.f32.mrb[0].mxu0
    %v404 = vadd.f32 %v305, %v403
    %v405 = vpop.f32.mrb[0].mxu0
    %406 = vmatprep.mubr.f32.mxu0 0.0
    %407 = vmatmul.mubr.f32.gmra.mrb[0].mxu0 %v275
    %v408 = vpop.f32.mrb[0].mxu0
    %v409 = vadd.f32 %v305, %v408
    %v410 = vpop.f32.mrb[0].mxu0
    %411 = vmatprep.mubr.f32.mxu0 0.0
    %412 = vmatmul.mubr.f32.gmra.mrb[0].mxu0 %v276
    %v413 = vpop.f32.mrb[0].mxu0
    %v414 = vadd.f32 %v305, %v413
    %v415 = vpop.f32.mrb[0].mxu0
    %416 = vmatprep.mubr.f32.mxu0 0.0
    %417 = vmatmul.mubr.f32.gmra.mrb[0].mxu0 %v277
    %v418 = vpop.f32.mrb[0].mxu0
    %v419 = vadd.f32 %v305, %v418
    %v420 = vpop.f32.mrb[0].mxu0
    %421 = vmatprep.mubr.f32.mxu0 0.0
    %422 = vmatmul.mubr.f32.gmra.mrb[0].mxu0 %v278
    %v423 = vpop.f32.mrb[0].mxu0
    %v424 = vadd.f32 %v305, %v423
    %v425 = vpop.f32.mrb[0].mxu0
    %426 = vmatprep.mubr.f32.mxu0 0.0
    %427 = vmatmul.mubr.f32.gmra.mrb[0].mxu0 %v279
    %v428 = vpop.f32.mrb[0].mxu0
    %v429 = vadd.f32 %v305, %v428
    %v430 = vpop.f32.mrb[0].mxu0
    %431 = vmatprep.mubr.f32.mxu0 0.0
    %432 = vmatmul.mubr.f32.gmra.mrb[0].mxu0 %v280
    %v433 = vpop.f32.mrb[0].mxu0
    %v434 = vadd.f32 %v305, %v433
    %v435 = vpop.f32.mrb[0].mxu0
    %436 = vmatprep.mubr.f32.mxu0 0.0
    %437 = vmatmul.mubr.f32.gmra.mrb[0].mxu0 %v281
    %v438 = vpop.f32.mrb[0].mxu0
    %v439 = vadd.f32 %v305, %v438
    %v440 = vpop.f32.mrb[0].mxu0
    %441 = vmatprep.mubr.f32.mxu0 0.0
    %442 = vmatmul.mubr.f32.gmra.mrb[0].mxu0 %v282
    %v443 = vpop.f32.mrb[0].mxu0
    %v444 = vadd.f32 %v305, %v443
    %v445 = vpop.f32.mrb[0].mxu0
    %446 = vmatprep.mubr.f32.mxu0 0.0
    %447 = vmatmul.mubr.f32.gmra.mrb[0].mxu0 %v283
    %v448 = vpop.f32.mrb[0].mxu0
    %v449 = vadd.f32 %v305, %v448
    %v450 = vpop.f32.mrb[0].mxu0
    %451 = vdwg.mxu0
    %v452 = vmax.f32 %v374, 0.0
    %v453 = vmax.f32 %v379, 0.0
    %v454 = vmax.f32 %v384, 0.0
    %v455 = vmax.f32 %v389, 0.0
    %v456 = vmax.f32 %v394, 0.0
    %v457 = vmax.f32 %v399, 0.0
    %v458 = vmax.f32 %v404, 0.0
    %v459 = vmax.f32 %v409, 0.0
    %v460 = vmax.f32 %v414, 0.0
    %v461 = vmax.f32 %v419, 0.0
    %v462 = vmax.f32 %v424, 0.0
    %v463 = vmax.f32 %v429, 0.0
    %v464 = vmax.f32 %v434, 0.0
    %v465 = vmax.f32 %v439, 0.0
    %v466 = vmax.f32 %v444, 0.0
    %v467 = vmax.f32 %v449, 0.0
    %v468 = vld [vmem:[#allocation3] sm:$0xff]
    %v469 = vld [vmem:[#allocation3 + $0x8] sm:$0xff]
    %v470 = vld [vmem:[#allocation3 + $0x10] sm:$0xff]
    %v471 = vld [vmem:[#allocation3 + $0x18] sm:$0xff]
    %v472 = vld [vmem:[#allocation3 + $0x20] sm:$0xff]
    %v473 = vld [vmem:[#allocation3 + $0x28] sm:$0xff]
    %v474 = vld [vmem:[#allocation3 + $0x30] sm:$0xff]
    %v475 = vld [vmem:[#allocation3 + $0x38] sm:$0xff]
    %v476 = vld [vmem:[#allocation3 + $0x40] sm:$0xff]
    %v477 = vld [vmem:[#allocation3 + $0x48] sm:$0xff]
    %v478 = vld [vmem:[#allocation3 + $0x50] sm:$0xff]
    %v479 = vld [vmem:[#allocation3 + $0x58] sm:$0xff]
    %v480 = vld [vmem:[#allocation3 + $0x60] sm:$0xff]
    %v481 = vld [vmem:[#allocation3 + $0x68] sm:$0xff]
    %v482 = vld [vmem:[#allocation3 + $0x70] sm:$0xff]
    %v483 = vld [vmem:[#allocation3 + $0x78] sm:$0xff]
    %v484 = vld [vmem:[%s6] sm:$0x1]
    %v486 = vlaneseq
    %v487 = vshrl.u32 %v486, 7
    %v488 = vsub.s32 0, %v487
    %v489 = vrot.slane %v484, %v488
    %491 = vmatprep.subr.mxu0 0.0
    %492 = vmatpush1.msra.mxu0 %v468
    %493 = vmatprep.subr.mxu0 0.0
    %494 = vmatpush1.msra.mxu0 %v469
    %495 = vmatprep.subr.mxu0 0.0
    %496 = vmatpush1.msra.mxu0 %v470
    %497 = vmatprep.subr.mxu0 0.0
    %498 = vmatpush1.msra.mxu0 %v471
    %499 = vmatprep.subr.mxu0 0.0
    %500 = vmatpush1.msra.mxu0 %v472
    %501 = vmatprep.subr.mxu0 0.0
    %502 = vmatpush1.msra.mxu0 %v473
    %503 = vmatprep.subr.mxu0 0.0
    %504 = vmatpush1.msra.mxu0 %v474
    %505 = vmatprep.subr.mxu0 0.0
    %506 = vmatpush1.msra.mxu0 %v475
    %507 = vmatprep.subr.mxu0 0.0
    %508 = vmatpush1.msra.mxu0 %v476
    %509 = vmatprep.subr.mxu0 0.0
    %510 = vmatpush1.msra.mxu0 %v477
    %511 = vmatprep.subr.mxu0 0.0
    %512 = vmatpush1.msra.mxu0 %v478
    %513 = vmatprep.subr.mxu0 0.0
    %514 = vmatpush1.msra.mxu0 %v479
    %515 = vmatprep.subr.mxu0 0.0
    %516 = vmatpush1.msra.mxu0 %v480
    %517 = vmatprep.subr.mxu0 0.0
    %518 = vmatpush1.msra.mxu0 %v481
    %519 = vmatprep.subr.mxu0 0.0
    %520 = vmatpush1.msra.mxu0 %v482
    %521 = vmatprep.subr.mxu0 0.0
    %522 = vmatpush1.msra.mxu0 %v483
    %523 = vmatprep.subr.mxu0 0.0
    %524 = vmatpush1.msra.mxu0 0.0
    %525 = vmatprep.subr.mxu0 0.0
    %526 = vmatpush1.msra.mxu0 0.0
    %527 = vmatprep.subr.mxu0 0.0
    %528 = vmatpush1.msra.mxu0 0.0
    %529 = vmatprep.subr.mxu0 0.0
    %530 = vmatpush1.msra.mxu0 0.0
    %531 = vmatprep.subr.mxu0 0.0
    %532 = vmatpush1.msra.mxu0 0.0
    %533 = vmatprep.subr.mxu0 0.0
    %534 = vmatpush1.msra.mxu0 0.0
    %535 = vmatprep.subr.mxu0 0.0
    %536 = vmatpush1.msra.mxu0 0.0
    %537 = vmatprep.subr.mxu0 0.0
    %538 = vmatpush1.msra.mxu0 0.0
    %539 = vmatprep.subr.mxu0 0.0
    %540 = vmatpush1.msra.mxu0 0.0
    %541 = vmatprep.subr.mxu0 0.0
    %542 = vmatpush1.msra.mxu0 0.0
    %543 = vmatprep.subr.mxu0 0.0
    %544 = vmatpush1.msra.mxu0 0.0
    %545 = vmatprep.subr.mxu0 0.0
    %546 = vmatpush1.msra.mxu0 0.0
    %547 = vmatprep.subr.mxu0 0.0
    %548 = vmatpush1.msra.mxu0 0.0
    %549 = vmatprep.subr.mxu0 0.0
    %550 = vmatpush1.msra.mxu0 0.0
    %551 = vmatprep.subr.mxu0 0.0
    %552 = vmatpush1.msra.mxu0 0.0
    %553 = vmatprep.subr.mxu0 0.0
    %554 = vmatpush1.msra.mxu0 0.0
    %555 = vmatprep.mubr.f32.mxu0 0.0
    %556 = vmatmul.mubr.f32.gmra.mrb[0].mxu0 %v452
    %v557 = vpop.f32.mrb[0].mxu0
    %v558 = vadd.f32 %v489, %v557
    %v559 = vpop.f32.mrb[0].mxu0
    %560 = vmatprep.mubr.f32.mxu0 0.0
    %561 = vmatmul.mubr.f32.gmra.mrb[0].mxu0 %v453
    %v562 = vpop.f32.mrb[0].mxu0
    %v563 = vadd.f32 %v489, %v562
    %v564 = vpop.f32.mrb[0].mxu0
    %565 = vmatprep.mubr.f32.mxu0 0.0
    %566 = vmatmul.mubr.f32.gmra.mrb[0].mxu0 %v454
    %v567 = vpop.f32.mrb[0].mxu0
    %v568 = vadd.f32 %v489, %v567
    %v569 = vpop.f32.mrb[0].mxu0
    %570 = vmatprep.mubr.f32.mxu0 0.0
    %571 = vmatmul.mubr.f32.gmra.mrb[0].mxu0 %v455
    %v572 = vpop.f32.mrb[0].mxu0
    %v573 = vadd.f32 %v489, %v572
    %v574 = vpop.f32.mrb[0].mxu0
    %575 = vmatprep.mubr.f32.mxu0 0.0
    %576 = vmatmul.mubr.f32.gmra.mrb[0].mxu0 %v456
    %v577 = vpop.f32.mrb[0].mxu0
    %v578 = vadd.f32 %v489, %v577
    %v579 = vpop.f32.mrb[0].mxu0
    %580 = vmatprep.mubr.f32.mxu0 0.0
    %581 = vmatmul.mubr.f32.gmra.mrb[0].mxu0 %v457
    %v582 = vpop.f32.mrb[0].mxu0
    %v583 = vadd.f32 %v489, %v582
    %v584 = vpop.f32.mrb[0].mxu0
    %585 = vmatprep.mubr.f32.mxu0 0.0
    %586 = vmatmul.mubr.f32.gmra.mrb[0].mxu0 %v458
    %v587 = vpop.f32.mrb[0].mxu0
    %v588 = vadd.f32 %v489, %v587
    %v589 = vpop.f32.mrb[0].mxu0
    %590 = vmatprep.mubr.f32.mxu0 0.0
    %591 = vmatmul.mubr.f32.gmra.mrb[0].mxu0 %v459
    %v592 = vpop.f32.mrb[0].mxu0
    %v593 = vadd.f32 %v489, %v592
    %v594 = vpop.f32.mrb[0].mxu0
    %595 = vmatprep.mubr.f32.mxu0 0.0
    %596 = vmatmul.mubr.f32.gmra.mrb[0].mxu0 %v460
    %v597 = vpop.f32.mrb[0].mxu0
    %v598 = vadd.f32 %v489, %v597
    %v599 = vpop.f32.mrb[0].mxu0
    %600 = vmatprep.mubr.f32.mxu0 0.0
    %601 = vmatmul.mubr.f32.gmra.mrb[0].mxu0 %v461
    %v602 = vpop.f32.mrb[0].mxu0
    %v603 = vadd.f32 %v489, %v602
    %v604 = vpop.f32.mrb[0].mxu0
    %605 = vmatprep.mubr.f32.mxu0 0.0
    %606 = vmatmul.mubr.f32.gmra.mrb[0].mxu0 %v462
    %v607 = vpop.f32.mrb[0].mxu0
    %v608 = vadd.f32 %v489, %v607
    %v609 = vpop.f32.mrb[0].mxu0
    %610 = vmatprep.mubr.f32.mxu0 0.0
    %611 = vmatmul.mubr.f32.gmra.mrb[0].mxu0 %v463
    %v612 = vpop.f32.mrb[0].mxu0
    %v613 = vadd.f32 %v489, %v612
    %v614 = vpop.f32.mrb[0].mxu0
    %615 = vmatprep.mubr.f32.mxu0 0.0
    %616 = vmatmul.mubr.f32.gmra.mrb[0].mxu0 %v464
    %v617 = vpop.f32.mrb[0].mxu0
    %v618 = vadd.f32 %v489, %v617
    %v619 = vpop.f32.mrb[0].mxu0
    %620 = vmatprep.mubr.f32.mxu0 0.0
    %621 = vmatmul.mubr.f32.gmra.mrb[0].mxu0 %v465
    %v622 = vpop.f32.mrb[0].mxu0
    %v623 = vadd.f32 %v489, %v622
    %v624 = vpop.f32.mrb[0].mxu0
    %625 = vmatprep.mubr.f32.mxu0 0.0
    %626 = vmatmul.mubr.f32.gmra.mrb[0].mxu0 %v466
    %v627 = vpop.f32.mrb[0].mxu0
    %v628 = vadd.f32 %v489, %v627
    %v629 = vpop.f32.mrb[0].mxu0
    %630 = vmatprep.mubr.f32.mxu0 0.0
    %631 = vmatmul.mubr.f32.gmra.mrb[0].mxu0 %v467
    %v632 = vpop.f32.mrb[0].mxu0
    %v633 = vadd.f32 %v489, %v632
    %v634 = vpop.f32.mrb[0].mxu0
    %635 = vdwg.mxu0
    %v636 = vmax.f32 %v558, 0.0
    %v637 = vmax.f32 %v563, 0.0
    %v638 = vmax.f32 %v568, 0.0
    %v639 = vmax.f32 %v573, 0.0
    %v640 = vmax.f32 %v578, 0.0
    %v641 = vmax.f32 %v583, 0.0
    %v642 = vmax.f32 %v588, 0.0
    %v643 = vmax.f32 %v593, 0.0
    %v644 = vmax.f32 %v598, 0.0
    %v645 = vmax.f32 %v603, 0.0
    %v646 = vmax.f32 %v608, 0.0
    %v647 = vmax.f32 %v613, 0.0
    %v648 = vmax.f32 %v618, 0.0
    %v649 = vmax.f32 %v623, 0.0
    %v650 = vmax.f32 %v628, 0.0
    %v651 = vmax.f32 %v633, 0.0
    %v652 = vld [vmem:[%s7] sm:$0x1]
    %v653 = vld [vmem:[#allocation2] sm:$0x1]
    %v655 = vlaneseq
    %v656 = vshrl.u32 %v655, 7
    %v657 = vsub.s32 0, %v656
    %v658 = vrot.slane %v652, %v657
    %v660 = vmul.f32 %v636, %v658
    %v661 = vmul.f32 %v637, %v658
    %v662 = vmul.f32 %v638, %v658
    %v663 = vmul.f32 %v639, %v658
    %v664 = vmul.f32 %v640, %v658
    %v665 = vmul.f32 %v641, %v658
    %v666 = vmul.f32 %v642, %v658
    %v667 = vmul.f32 %v643, %v658
    %v668 = vmul.f32 %v644, %v658
    %v669 = vmul.f32 %v645, %v658
    %v670 = vmul.f32 %v646, %v658
    %v671 = vmul.f32 %v647, %v658
    %v672 = vmul.f32 %v648, %v658
    %v673 = vmul.f32 %v649, %v658
    %v674 = vmul.f32 %v650, %v658
    %v675 = vmul.f32 %v651, %v658
    %676 = vadd.xlane.f32.xlu0 %v660
    %v677 = vpop.xlane.xlu0 %676
    %678 = vadd.xlane.f32.xlu0 %v661
    %v679 = vpop.xlane.xlu0 %678
    %680 = vadd.xlane.f32.xlu0 %v662
    %v681 = vpop.xlane.xlu0 %680
    %682 = vadd.xlane.f32.xlu0 %v663
    %v683 = vpop.xlane.xlu0 %682
    %684 = vadd.xlane.f32.xlu0 %v664
    %v685 = vpop.xlane.xlu0 %684
    %686 = vadd.xlane.f32.xlu0 %v665
    %v687 = vpop.xlane.xlu0 %686
    %688 = vadd.xlane.f32.xlu0 %v666
    %v689 = vpop.xlane.xlu0 %688
    %690 = vadd.xlane.f32.xlu0 %v667
    %v691 = vpop.xlane.xlu0 %690
    %692 = vadd.xlane.f32.xlu0 %v668
    %v693 = vpop.xlane.xlu0 %692
    %694 = vadd.xlane.f32.xlu0 %v669
    %v695 = vpop.xlane.xlu0 %694
    %696 = vadd.xlane.f32.xlu0 %v670
    %v697 = vpop.xlane.xlu0 %696
    %698 = vadd.xlane.f32.xlu0 %v671
    %v699 = vpop.xlane.xlu0 %698
    %700 = vadd.xlane.f32.xlu0 %v672
    %v701 = vpop.xlane.xlu0 %700
    %702 = vadd.xlane.f32.xlu0 %v673
    %v703 = vpop.xlane.xlu0 %702
    %704 = vadd.xlane.f32.xlu0 %v674
    %v705 = vpop.xlane.xlu0 %704
    %706 = vadd.xlane.f32.xlu0 %v675
    %v707 = vpop.xlane.xlu0 %706
    %709 = vset.pattern.permute.xlu0 0
    %710 = vperm.xlu0 %709, %v653
    %v711 = vpop.permute.xlu0 %710
    %v713 = vlaneseq
    %v714 = vshrl.u32 %v713, 7
    %v715 = vsub.s32 0, %v714
    %v716 = vrot.slane %v711, %v715
    %v717 = vadd.f32 %v677, %v716
    %v718 = vadd.f32 %v679, %v716
    %v719 = vadd.f32 %v681, %v716
    %v720 = vadd.f32 %v683, %v716
    %v721 = vadd.f32 %v685, %v716
    %v722 = vadd.f32 %v687, %v716
    %v723 = vadd.f32 %v689, %v716
    %v724 = vadd.f32 %v691, %v716
    %v725 = vadd.f32 %v693, %v716
    %v726 = vadd.f32 %v695, %v716
    %v727 = vadd.f32 %v697, %v716
    %v728 = vadd.f32 %v699, %v716
    %v729 = vadd.f32 %v701, %v716
    %v730 = vadd.f32 %v703, %v716
    %v731 = vadd.f32 %v705, %v716
    %v732 = vadd.f32 %v707, %v716
    %v749 = vlaneseq
    %v750 = vand.u32 %v749, 127
    %v751 = vlaneseq
    %v752 = vshrl.u32 %v751, 7
    %v753 = vsub.s32 %v750, %v752
    %v754 = vrot.slane %v717, %v753
    %v755 = vadd.s32 %v750, 4294967288
    %v756 = vlaneseq
    %v757 = vshrl.u32 %v756, 7
    %v758 = vsub.s32 %v755, %v757
    %v759 = vrot.slane %v718, %v758
    %vm760 = vcmask 130112
    %v761 = vsel %vm760, %v759, %v754
    %v762 = vadd.s32 %v750, 4294967280
    %v763 = vlaneseq
    %v764 = vshrl.u32 %v763, 7
    %v765 = vsub.s32 %v762, %v764
    %v766 = vrot.slane %v719, %v765
    %vm767 = vcmask 195712
    %v768 = vsel %vm767, %v766, %v761
    %v769 = vadd.s32 %v750, 4294967272
    %v770 = vlaneseq
    %v771 = vshrl.u32 %v770, 7
    %v772 = vsub.s32 %v769, %v771
    %v773 = vrot.slane %v720, %v772
    %vm774 = vcmask 261312
    %v775 = vsel %vm774, %v773, %v768
    %v776 = vadd.s32 %v750, 4294967264
    %v777 = vlaneseq
    %v778 = vshrl.u32 %v777, 7
    %v779 = vsub.s32 %v776, %v778
    %v780 = vrot.slane %v721, %v779
    %vm781 = vcmask 326912
    %v782 = vsel %vm781, %v780, %v775
    %v783 = vadd.s32 %v750, 4294967256
    %v784 = vlaneseq
    %v785 = vshrl.u32 %v784, 7
    %v786 = vsub.s32 %v783, %v785
    %v787 = vrot.slane %v722, %v786
    %vm788 = vcmask 392512
    %v789 = vsel %vm788, %v787, %v782
    %v790 = vadd.s32 %v750, 4294967248
    %v791 = vlaneseq
    %v792 = vshrl.u32 %v791, 7
    %v793 = vsub.s32 %v790, %v792
    %v794 = vrot.slane %v723, %v793
    %vm795 = vcmask 458112
    %v796 = vsel %vm795, %v794, %v789
    %v797 = vadd.s32 %v750, 4294967240
    %v798 = vlaneseq
    %v799 = vshrl.u32 %v798, 7
    %v800 = vsub.s32 %v797, %v799
    %v801 = vrot.slane %v724, %v800
    %vm802 = vcmask 523712
    %v803 = vsel %vm802, %v801, %v796
    %v804 = vadd.s32 %v750, 4294967232
    %v805 = vlaneseq
    %v806 = vshrl.u32 %v805, 7
    %v807 = vsub.s32 %v804, %v806
    %v808 = vrot.slane %v725, %v807
    %vm809 = vcmask 589312
    %v810 = vsel %vm809, %v808, %v803
    %v811 = vadd.s32 %v750, 4294967224
    %v812 = vlaneseq
    %v813 = vshrl.u32 %v812, 7
    %v814 = vsub.s32 %v811, %v813
    %v815 = vrot.slane %v726, %v814
    %vm816 = vcmask 654912
    %v817 = vsel %vm816, %v815, %v810
    %v818 = vadd.s32 %v750, 4294967216
    %v819 = vlaneseq
    %v820 = vshrl.u32 %v819, 7
    %v821 = vsub.s32 %v818, %v820
    %v822 = vrot.slane %v727, %v821
    %vm823 = vcmask 720512
    %v824 = vsel %vm823, %v822, %v817
    %v825 = vadd.s32 %v750, 4294967208
    %v826 = vlaneseq
    %v827 = vshrl.u32 %v826, 7
    %v828 = vsub.s32 %v825, %v827
    %v829 = vrot.slane %v728, %v828
    %vm830 = vcmask 786112
    %v831 = vsel %vm830, %v829, %v824
    %v832 = vadd.s32 %v750, 4294967200
    %v833 = vlaneseq
    %v834 = vshrl.u32 %v833, 7
    %v835 = vsub.s32 %v832, %v834
    %v836 = vrot.slane %v729, %v835
    %vm837 = vcmask 851712
    %v838 = vsel %vm837, %v836, %v831
    %v839 = vadd.s32 %v750, 4294967192
    %v840 = vlaneseq
    %v841 = vshrl.u32 %v840, 7
    %v842 = vsub.s32 %v839, %v841
    %v843 = vrot.slane %v730, %v842
    %vm844 = vcmask 917312
    %v845 = vsel %vm844, %v843, %v838
    %v846 = vadd.s32 %v750, 4294967184
    %v847 = vlaneseq
    %v848 = vshrl.u32 %v847, 7
    %v849 = vsub.s32 %v846, %v848
    %v850 = vrot.slane %v731, %v849
    %vm851 = vcmask 982912
    %v852 = vsel %vm851, %v850, %v845
    %v853 = vadd.s32 %v750, 4294967176
    %v854 = vlaneseq
    %v855 = vshrl.u32 %v854, 7
    %v856 = vsub.s32 %v853, %v855
    %v857 = vrot.slane %v732, %v856
    %vm858 = vcmask 1048512
    %v859 = vsel %vm858, %v857, %v852
    %861 = vst [vmem:[#allocation6] sm:$0x1] %v859
    // Predicated region
    $region42: #{tpu_custom_call.1} parent=1 // pred_check
      _
    $region43: #{tpu_custom_call.1} parent=1 // pred_check_branch
      %863 = sbr.rel (0) target = $region45
    $region44: #{tpu_custom_call.1} parent=1 // pred_region
      %s865 = ssub.s32 16, 16
      %866 = vsyncadd [#allocation5], %s865
      %s868 = sshll.u32 [#allocation6], 4
      %s869 = int_to_ptr.vmem [resolvable:$true] %s868
      %871 = dma.vmem_to_hbm [thread:$0]  %s869, 16, %s9, [#allocation5]
    $region45: #{tpu_custom_call.1} parent=1 // pred_fallthru
      _
    // Predicated region
    $region46: #{tpu_custom_call.1} parent=1 // pred_check
      _
    $region47: #{tpu_custom_call.1} parent=1 // pred_check_branch
      %873 = sbr.rel (0) target = $region49
    $region48: #{tpu_custom_call.1} parent=1 // pred_region
      %874 = dma.done [#allocation5], 16
    $region49: #{tpu_custom_call.1} parent=1 // pred_fallthru
      _
    %875 = vsyncpa [#allocation4], 1
    %876 = vsyncpa [#allocation5], 1

</llo_original>
